<compile_context>
chip_gen: v5e
topology: v5e:2x2
jax: 0.10.0
libtpu: 0.0.40
codegen_flags: <defaults>
</compile_context>

<pallas_src>
import jax
import jax.numpy as jnp
from jax.experimental import pallas as pl
from jax.experimental.pallas import tpu as pltpu


def _value_kernel(x_ref, wt_ref, o_ref):
    # x_ref: (TM, K), wt_ref: (K, N)  [pre-transposed], o_ref: (TM, N)
    o_ref[...] = jnp.dot(
        x_ref[...], wt_ref[...], preferred_element_type=jnp.float32
    ).astype(o_ref.dtype)


def value_forward(x, weight, *, tm=2048, small_to_xla=True):
    """Forward pass of `Value`: x @ weight.T.

    x:      (B, S, dim_input)   -- any float dtype (bf16 recommended upstream)
    weight: (dim_val, dim_input) -- PyTorch nn.Linear layout.
    returns (B, S, dim_val) in x.dtype.
    """
    B, S, K = x.shape
    N, Kw = weight.shape
    assert Kw == K
    M = B * S
    out_dtype = x.dtype
    itemsize = jnp.dtype(x.dtype).itemsize

    # --- tiny-problem dispatch: a single fused XLA op beats any pallas_call --
    if small_to_xla and M * (K + N) * itemsize < (1 << 20):
        return (x.reshape(M, K) @ weight.T.astype(x.dtype)).reshape(B, S, N)

    # --- one-time weight prep (in a real model: done at parameter init) -----
    wt = weight.T.astype(x.dtype)  # (K, N), MXU-native orientation
    x2d = x.reshape(M, K)

    # --- tiling over M --------------------------------------------------------
    # Small M: single full-extent block (always a legal block shape).
    # Larger M: cap at `tm`, but keep grid_m >= 2 so the "parallel" axis can
    # shard across both TensorCores on v7x.  TM is a multiple of 8.
    if M <= 256:
        TM = M
    else:
        half = ((pl.cdiv(M, 2) + 7) // 8) * 8
        TM = min(tm, half)
    grid_m = pl.cdiv(M, TM)

    cost = pl.CostEstimate(
        flops=2 * M * N * K,
        bytes_accessed=(M * K + K * N) * itemsize
        + M * N * jnp.dtype(out_dtype).itemsize,
        transcendentals=0,
    )

    out2d = pl.pallas_call(
        _value_kernel,
        out_shape=jax.ShapeDtypeStruct((M, N), out_dtype),
        grid_spec=pltpu.PrefetchScalarGridSpec(
            num_scalar_prefetch=0,
            grid=(grid_m,),
            in_specs=[
                pl.BlockSpec((TM, K), lambda i: (i, 0)),  # x tile, marches over M
                pl.BlockSpec((K, N), lambda i: (0, 0)),   # weight, VMEM-resident
            ],
            out_specs=pl.BlockSpec((TM, N), lambda i: (i, 0)),
        ),
        compiler_params=pltpu.CompilerParams(
            dimension_semantics=("parallel",),  # shard M across TCs (v7x megacore)
        ),
        cost_estimate=cost,
    )(x2d, wt)

    return out2d.reshape(B, S, N)


if __name__ == "__main__":
    # Small shapes consistent with the module: dim_input=32, dim_val=64.
    batch, seq, dim_input, dim_val = 2, 8, 32, 64

    key = jax.random.PRNGKey(0)
    kx, kw = jax.random.split(key)

    x = jax.random.normal(kx, (batch, seq, dim_input), dtype=jnp.float32)
    # Deterministic init mimicking nn.Linear default (uniform in ±1/sqrt(fan_in)).
    bound = 1.0 / (dim_input ** 0.5)
    weight = jax.random.uniform(
        kw, (dim_val, dim_input), minval=-bound, maxval=bound, dtype=jnp.float32
    )

    # --- small-shape check (single block; force the Pallas path) -------------
    out = value_forward(x, weight, small_to_xla=False)
    out = jax.block_until_ready(out)
    ref = x @ weight.T
    assert out.shape == (batch, seq, dim_val)
    assert jnp.allclose(out, ref, atol=1e-5, rtol=1e-5)

    # --- larger check exercising the multi-block tiled/pipelined path --------
    xb = jax.random.normal(kx, (4, 300, dim_input), dtype=jnp.float32)  # M=1200, grid_m=2
    out_b = jax.block_until_ready(value_forward(xb, weight, small_to_xla=False))
    ref_b = xb @ weight.T
    assert out_b.shape == (4, 300, dim_val)
    assert jnp.allclose(out_b, ref_b, atol=1e-5, rtol=1e-5)

    print("KERNEL_OK")
</pallas_src>

<mosaic_0001>
module attributes {stable_mosaic.version = 11 : i64} {
  func.func @_value_kernel(%arg0: i32, %arg1: memref<16x32xf32, #tpu.memory_space<vmem>>, %arg2: memref<32x64xf32, #tpu.memory_space<vmem>>, %arg3: memref<16x64xf32, #tpu.memory_space<vmem>>) attributes {dimension_semantics = [#tpu.dimension_semantics<parallel>], iteration_bounds = array<i64: 1>, scalar_prefetch = 0 : i64, scratch_operands = 0 : i64, tpu.core_type = #tpu.core_type<tc>, window_params = [{transform_indices = @transform_0, window_bounds = array<i64: 16, 32>}, {pipeline_mode = #tpu.pipeline_mode<synchronous>, transform_indices = @transform_1, window_bounds = array<i64: 32, 64>}, {transform_indices = @transform_2, window_bounds = array<i64: 16, 64>}]} {
    %c0 = arith.constant 0 : index
    %c0_0 = arith.constant 0 : index
    %0 = vector.load %arg1[%c0, %c0_0] : memref<16x32xf32, #tpu.memory_space<vmem>>, vector<16x32xf32>
    %c0_1 = arith.constant 0 : index
    %c0_2 = arith.constant 0 : index
    %1 = vector.load %arg2[%c0_1, %c0_2] : memref<32x64xf32, #tpu.memory_space<vmem>>, vector<32x64xf32>
    %cst = arith.constant dense<0.000000e+00> : vector<16x64xf32>
    %2 = tpu.matmul %0, %1, %cst {dimension_numbers = #tpu.dot_dimension_numbers<[1], [0], [0], [1], [0, 0, 1, 1], [], []>} : vector<16x32xf32>, vector<32x64xf32>, vector<16x64xf32> -> vector<16x64xf32>
    %c0_3 = arith.constant 0 : index
    %c0_4 = arith.constant 0 : index
    %3 = vector.load %arg3[%c0_3, %c0_4] : memref<16x64xf32, #tpu.memory_space<vmem>>, vector<16x64xf32>
    tpu.vector_store %arg3[%c0_3, %c0_4], %2 {strides = array<i32>} : memref<16x64xf32, #tpu.memory_space<vmem>>, vector<16x64xf32>,
    return
  }
  func.func @transform_0(%arg0: i32) -> (i32, i32) {
    %c0_i32 = arith.constant 0 : i32
    %c0_i32_0 = arith.constant 0 : i32
    return %arg0, %c0_i32 : i32, i32
  }
  func.func @transform_1(%arg0: i32) -> (i32, i32) {
    %c0_i32 = arith.constant 0 : i32
    %c0_i32_0 = arith.constant 0 : i32
    %c0_i32_1 = arith.constant 0 : i32
    return %c0_i32, %c0_i32_0 : i32, i32
  }
  func.func @transform_2(%arg0: i32) -> (i32, i32) {
    %c0_i32 = arith.constant 0 : i32
    %c0_i32_0 = arith.constant 0 : i32
    return %arg0, %c0_i32 : i32, i32
  }
}

</mosaic_0001>

<llo_original>
// kernel: tpu_custom_call.1
$region0: #{tpu_custom_call.1}
  #allocation0 [shape = 'u32[]', space=smem, size = 0x4, offset = 0x4, fixed_abs, tag = 'smem constant byte address 0x4 - core index']
  #allocation1 [shape = 'u32[72,128]{1,0:T(1,128)}', space=vmem, size = 0x9000, scoped, tag = 'internal scratch']
  %s0 = inlined_call_operand.hbm [shape: f32[16,32], index: 0, kind: input, shape index: {}]
  %s1 = inlined_call_operand.hbm [shape: f32[32,64], index: 1, kind: input, shape index: {}]
  %s2 = inlined_call_operand.hbm [shape: f32[16,64], index: 2, kind: output, shape index: {}]
  %s3 = sld [smem:[#allocation0]]
  $region26: #{tpu_custom_call.1} parent=0
    _
  %s5 = ssub.s32 1, %s3
  %s6 = scalar_select 0, %s5, %s3
  $region1: #{tpu_custom_call.1} parent=0
    #allocation2 [shape = 'u8[8192]{0}', space=vmem, size = 0x2000, scoped, tag = 'input window, operand 0, single buffered']
    #allocation3 [shape = 's32[1]{0}', space=sflag, size = 0x4, scoped, tag = 'scoped memory for tpu_custom_call.1']
    #allocation4 [shape = 's32[1]{0}', space=sflag, size = 0x4, scoped, tag = 'scoped memory for tpu_custom_call.1']
    #allocation5 [shape = 'u8[16384]{0}', space=vmem, size = 0x4000, scoped, tag = 'input window, operand 1, single buffered']
    #allocation6 [shape = 's32[1]{0}', space=sflag, size = 0x4, scoped, tag = 'scoped memory for tpu_custom_call.1']
    #allocation7 [shape = 'u8[8192]{0}', space=vmem, size = 0x2000, scoped, tag = 'output window, operand 0, single buffered']
    %7 = vsyncpa [#allocation3], 0
    %8 = vsyncpa [#allocation6], 0
    %9 = vsyncpa [#allocation4], 0
    // Predicated region
    $region2: #{tpu_custom_call.1} parent=1 // pred_check
      _
    $region3: #{tpu_custom_call.1} parent=1 // pred_check_branch
      %11 = sbr.rel (0) target = $region5
    $region4: #{tpu_custom_call.1} parent=1 // pred_region
      %13 = vsyncadd [#allocation3], 0
      %s14 = sshll.u32 %s0, 4
      %s15 = int_to_ptr.hbm [resolvable:$true] %s14
      %s16 = sshll.u32 [#allocation2], 4
      %s17 = int_to_ptr.vmem [resolvable:$true] %s16
      %22 = dma.hbm_to_vmem [thread:$0]  %s15, 256, %s17, [#allocation3], 128, 128, 8
    $region5: #{tpu_custom_call.1} parent=1 // pred_fallthru
      _
    // Predicated region
    $region6: #{tpu_custom_call.1} parent=1 // pred_check
      _
    $region7: #{tpu_custom_call.1} parent=1 // pred_check_branch
      %24 = sbr.rel (0) target = $region9
    $region8: #{tpu_custom_call.1} parent=1 // pred_region
      %26 = vsyncadd [#allocation6], 0
      %s27 = sshll.u32 %s1, 4
      %s28 = int_to_ptr.hbm [resolvable:$true] %s27
      %s29 = sshll.u32 [#allocation5], 4
      %s30 = int_to_ptr.vmem [resolvable:$true] %s29
      %35 = dma.hbm_to_vmem [thread:$0]  %s28, 512, %s30, [#allocation6], 128, 128, 8
    $region9: #{tpu_custom_call.1} parent=1 // pred_fallthru
      _
    // Predicated region
    $region10: #{tpu_custom_call.1} parent=1 // pred_check
      _
    $region11: #{tpu_custom_call.1} parent=1 // pred_check_branch
      %37 = sbr.rel (0) target = $region13
    $region12: #{tpu_custom_call.1} parent=1 // pred_region
      %39 = dma.done [#allocation3], 256
    $region13: #{tpu_custom_call.1} parent=1 // pred_fallthru
      _
    // Predicated region
    $region14: #{tpu_custom_call.1} parent=1 // pred_check
      _
    $region15: #{tpu_custom_call.1} parent=1 // pred_check_branch
      %41 = sbr.rel (0) target = $region17
    $region16: #{tpu_custom_call.1} parent=1 // pred_region
      %43 = dma.done [#allocation6], 512
    $region17: #{tpu_custom_call.1} parent=1 // pred_fallthru
      _
    %v44 = vld [vmem:[#allocation2] sm:$0xff]
    %v45 = vld [vmem:[#allocation2 + $0x8] sm:$0xff]
    %v46 = vld [vmem:[#allocation5] sm:$0xff]
    %v47 = vld [vmem:[#allocation5 + $0x8] sm:$0xff]
    %v48 = vld [vmem:[#allocation5 + $0x10] sm:$0xff]
    %v49 = vld [vmem:[#allocation5 + $0x18] sm:$0xff]
    %vm50 = vcmask 261120
    %v52 = vsel %vm50, %v44, 0
    %v55 = vsel %vm50, %v45, 0
    %57 = vmatpush.msra.mxu0 0.0
    %58 = vmatpush.msra.mxu0 0.0
    %59 = vmatpush.msra.mxu0 0.0
    %60 = vmatpush.msra.mxu0 0.0
    %61 = vmatpush.msra.mxu0 0.0
    %62 = vmatpush.msra.mxu0 0.0
    %63 = vmatpush.msra.mxu0 0.0
    %64 = vmatpush.msra.mxu0 0.0
    %65 = vmatpush.msra.mxu0 0.0
    %66 = vmatpush.msra.mxu0 0.0
    %67 = vmatpush.msra.mxu0 0.0
    %68 = vmatpush.msra.mxu0 0.0
    %69 = vmatpush.msra.mxu0 %v49
    %70 = vmatpush.msra.mxu0 %v48
    %71 = vmatpush.msra.mxu0 %v47
    %72 = vmatpush.msra.mxu0 %v46
    %73 = vmatmul.f32.gmra.mxu0 %v52
    %v74 = vpop.f32.mrf.mxu0
    %v75 = vadd.f32 0.0, %v74
    %76 = vmatmul.f32.gmra.mxu0 %v55
    %v77 = vpop.f32.mrf.mxu0
    %v78 = vadd.f32 0.0, %v77
    %79 = vdwg.mxu0
    %vm80 = vcmask 523264
    %81 = vst.msk [vmem:[#allocation7] sm:$0xff] %vm80, %v75
    %82 = vst.msk [vmem:[#allocation7 + $0x8] sm:$0xff] %vm80, %v78
    // Predicated region
    $region18: #{tpu_custom_call.1} parent=1 // pred_check
      _
    $region19: #{tpu_custom_call.1} parent=1 // pred_check_branch
      %84 = sbr.rel (0) target = $region21
    $region20: #{tpu_custom_call.1} parent=1 // pred_region
      %86 = vsyncadd [#allocation4], 0
      %s87 = sshll.u32 [#allocation7], 4
      %s88 = int_to_ptr.vmem [resolvable:$true] %s87
      %s89 = sshll.u32 %s2, 4
      %s90 = int_to_ptr.hbm [resolvable:$true] %s89
      %95 = dma.vmem_to_hbm [thread:$0]  %s88, 256, %s90, [#allocation4], 128, 128, 8
    $region21: #{tpu_custom_call.1} parent=1 // pred_fallthru
      _
    // Predicated region
    $region22: #{tpu_custom_call.1} parent=1 // pred_check
      _
    $region23: #{tpu_custom_call.1} parent=1 // pred_check_branch
      %97 = sbr.rel (0) target = $region25
    $region24: #{tpu_custom_call.1} parent=1 // pred_region
      %99 = dma.done [#allocation4], 256
    $region25: #{tpu_custom_call.1} parent=1 // pred_fallthru
      _
    %100 = vsyncpa [#allocation3], 1
    %101 = vsyncpa [#allocation6], 1
    %102 = vsyncpa [#allocation4], 1

</llo_original>
